<compile_context>
chip_gen: v7x
topology: tpu7x:2x2x1
jax: 0.10.0
libtpu: 0.0.40
codegen_flags: <defaults>
</compile_context>

<pallas_src>
import numpy as np
import jax
import jax.numpy as jnp
from jax.experimental import pallas as pl
from jax.experimental.pallas import tpu as pltpu


def build_dense_interpolation_W(seq_len: int, factor: int) -> np.ndarray:
    """Deterministic buffer identical to the PyTorch __init__."""
    W = np.zeros((factor, seq_len), dtype=np.float32)
    for t in range(seq_len):
        s = np.array(factor * (t + 1) / seq_len, dtype=np.float32)
        for m in range(factor):
            tmp = np.array(1 - np.abs(s - (1 + m)) / factor, dtype=np.float32)
            w = np.power(tmp, 2, dtype=np.float32)
            W[m, t] = w
    return W


def _kron_gemm_kernel(a_ref, x_ref, o_ref):
    # a_ref: (S*d, factor*d)  expanded weights W^T (x) I_d -- constant index
    #        map, fetched once and resident across the whole grid.
    # x_ref: (TB, S*d)        lane-packed block of TB batch elements.
    # o_ref: (TB, factor*d)   lane-packed u block.
    o_ref[...] = jnp.dot(
        x_ref[...], a_ref[...], preferred_element_type=jnp.float32
    ).astype(o_ref.dtype)


def _vpu_kernel(w_ref, x_ref, o_ref):
    # Fallback when the expanded weight is too large to keep resident:
    #   w_ref: (factor, S); x_ref: (TB, S, d); o_ref: (TB, factor, d)
    #   u[:, m, :] = sum_s W[m, s] * x[:, s, :]   (pure VPU work, f32 math)
    x = x_ref[...].astype(jnp.float32)
    w = w_ref[...].astype(jnp.float32)
    factor = o_ref.shape[1]
    for m in range(factor):                      # factor is small: static unroll
        wm = w[m, :][None, :, None]              # (1, S, 1) sublane broadcast
        o_ref[:, m, :] = jnp.sum(x * wm, axis=1).astype(o_ref.dtype)


def _choose_block_b(B, per_elem_bytes, target_bytes, min_steps):
    """~target_bytes of x per step; >= min_steps grid steps when B allows."""
    cap = min(B, max(1, target_bytes // per_elem_bytes))
    if B >= 2 * min_steps:
        cap = min(cap, max(1, B // min_steps))
    if cap >= B:
        return B                         # single step covering the whole batch
    tb = max(8, (cap // 8) * 8)          # 2-D blocks: second-minor multiple of 8
    return min(tb, B)


def dense_interpolation(x: jax.Array, W: jax.Array, *, block_b=None,
                        target_block_bytes=2 << 20, min_grid_steps=8,
                        kron_max_bytes=4 << 20, compute_dtype=None) -> jax.Array:
    """x: (B, seq_len, d); W: (factor, seq_len) -> (B, d, factor)."""
    B, S, d = x.shape
    factor = W.shape[0]
    assert W.shape == (factor, S)

    if compute_dtype is not None:
        # Optional bandwidth saving (e.g. bf16).  Note: also quantizes the
        # interpolation weights below; default stays f32 like the torch buffer.
        x = x.astype(compute_dtype)
    dtype = x.dtype
    isz = jnp.dtype(dtype).itemsize

    tb = block_b if block_b is not None else _choose_block_b(
        B, S * d * isz, target_block_bytes, min_grid_steps)
    grid = (pl.cdiv(B, tb),)             # tail block (if any) clipped by Pallas

    use_kron = (S * d) * (factor * d) * isz <= kron_max_bytes

    if use_kron:
        # A[s*d + j', m*d + j] = W[m, s] * delta(j', j)  ==  W^T (x) I_d
        A = jnp.kron(W.T, jnp.eye(d, dtype=W.dtype)).astype(dtype)
        operands = (A, x.reshape(B, S * d))      # zero-copy lane-packed view
        in_specs = [
            pl.BlockSpec((S * d, factor * d), lambda i: (0, 0)),   # resident
            pl.BlockSpec((tb, S * d), lambda i: (i, 0)),
        ]
        out_specs = pl.BlockSpec((tb, factor * d), lambda i: (i, 0))
        out_shape = jax.ShapeDtypeStruct((B, factor * d), dtype)
        kernel = _kron_gemm_kernel
        flops = 2 * B * (S * d) * (factor * d)   # actual MXU work
        w_bytes = (S * d) * (factor * d) * isz
    else:
        operands = (W.astype(dtype), x)
        in_specs = [
            pl.BlockSpec((factor, S), lambda i: (0, 0)),           # resident
            pl.BlockSpec((tb, S, d), lambda i: (i, 0, 0)),
        ]
        out_specs = pl.BlockSpec((tb, factor, d), lambda i: (i, 0, 0))
        out_shape = jax.ShapeDtypeStruct((B, factor, d), dtype)
        kernel = _vpu_kernel
        flops = 2 * B * S * factor * d
        w_bytes = factor * S * isz

    # Explicit VMEM budget: double-buffered x/out blocks + resident weights +
    # in-kernel f32 temporaries.  v7x has only 64 MiB VMEM per TensorCore.
    x_blk = tb * S * d * isz
    o_blk = tb * factor * d * isz
    vmem_needed = 2 * x_blk + 2 * o_blk + w_bytes + tb * (S + factor) * d * 4
    vmem_limit = int(min(max(vmem_needed + (4 << 20), 16 << 20), 48 << 20))

    u = pl.pallas_call(
        kernel,
        out_shape=out_shape,
        grid_spec=pl.GridSpec(grid=grid, in_specs=in_specs, out_specs=out_specs),
        compiler_params=pltpu.CompilerParams(
            dimension_semantics=("parallel",),
            vmem_limit_bytes=vmem_limit),
        cost_estimate=pl.CostEstimate(
            flops=flops, transcendentals=0,
            bytes_accessed=B * S * d * isz + w_bytes + B * factor * d * isz),
    )(*operands)

    u = u.reshape(B, factor, d)
    # torch's u.transpose_(1, 2): with factor < 128 a kernel-side (tb, d, factor)
    # store would be lane-sparse (masked vst); transpose the small (B, factor, d)
    # result with XLA instead.  This is a real copy on TPU, not a stride view.
    return jnp.swapaxes(u, 1, 2)


def dense_interpolation_ref(x: jax.Array, W: jax.Array) -> jax.Array:
    """Pure-JAX reference matching the PyTorch forward."""
    u = jnp.einsum("ms,bsd->bmd", W, x)      # bmm(W, x)
    return jnp.swapaxes(u, 1, 2)             # transpose(1, 2)


if __name__ == "__main__":
    # Small shapes consistent with the module: batch=2, seq_len=8, factor=4, d=32
    B, seq_len, factor, d = 2, 8, 4, 32

    W = jnp.asarray(build_dense_interpolation_W(seq_len, factor))

    key = jax.random.PRNGKey(0)
    x = jax.random.normal(key, (B, seq_len, d), dtype=jnp.float32)

    out = jax.block_until_ready(dense_interpolation(x, W))
    ref = dense_interpolation_ref(x, W)

    assert out.shape == (B, d, factor), out.shape
    np.testing.assert_allclose(np.asarray(out), np.asarray(ref),
                               rtol=1e-5, atol=1e-5)
    print("KERNEL_OK")
</pallas_src>

<mosaic_0001>
module attributes {stable_mosaic.version = 11 : i64} {
  func.func @_kron_gemm_kernel(%arg0: i32, %arg1: memref<256x128xf32, #tpu.memory_space<vmem>>, %arg2: memref<2x256xf32, #tpu.memory_space<vmem>>, %arg3: memref<2x128xf32, #tpu.memory_space<vmem>>) attributes {dimension_semantics = [#tpu.dimension_semantics<parallel>], iteration_bounds = array<i64: 1>, scalar_prefetch = 0 : i64, scratch_operands = 0 : i64, tpu.core_type = #tpu.core_type<tc>, window_params = [{pipeline_mode = #tpu.pipeline_mode<synchronous>, transform_indices = @transform_0, window_bounds = array<i64: 256, 128>}, {transform_indices = @transform_1, window_bounds = array<i64: 2, 256>}, {transform_indices = @transform_2, window_bounds = array<i64: 2, 128>}]} {
    %c0 = arith.constant 0 : index
    %c0_0 = arith.constant 0 : index
    %0 = vector.load %arg2[%c0, %c0_0] : memref<2x256xf32, #tpu.memory_space<vmem>>, vector<2x256xf32>
    %c0_1 = arith.constant 0 : index
    %c0_2 = arith.constant 0 : index
    %1 = vector.load %arg1[%c0_1, %c0_2] : memref<256x128xf32, #tpu.memory_space<vmem>>, vector<256x128xf32>
    %cst = arith.constant dense<0.000000e+00> : vector<2x128xf32>
    %2 = tpu.matmul %0, %1, %cst {dimension_numbers = #tpu.dot_dimension_numbers<[1], [0], [0], [1], [0, 0, 1, 1], [], []>} : vector<2x256xf32>, vector<256x128xf32>, vector<2x128xf32> -> vector<2x128xf32>
    %c0_3 = arith.constant 0 : index
    %c0_4 = arith.constant 0 : index
    %3 = vector.load %arg3[%c0_3, %c0_4] : memref<2x128xf32, #tpu.memory_space<vmem>>, vector<2x128xf32>
    tpu.vector_store %arg3[%c0_3, %c0_4], %2 {strides = array<i32>} : memref<2x128xf32, #tpu.memory_space<vmem>>, vector<2x128xf32>,
    return
  }
  func.func @transform_0(%arg0: i32) -> (i32, i32) {
    %c0_i32 = arith.constant 0 : i32
    %c0_i32_0 = arith.constant 0 : i32
    %c0_i32_1 = arith.constant 0 : i32
    return %c0_i32, %c0_i32_0 : i32, i32
  }
  func.func @transform_1(%arg0: i32) -> (i32, i32) {
    %c0_i32 = arith.constant 0 : i32
    %c0_i32_0 = arith.constant 0 : i32
    return %arg0, %c0_i32 : i32, i32
  }
  func.func @transform_2(%arg0: i32) -> (i32, i32) {
    %c0_i32 = arith.constant 0 : i32
    %c0_i32_0 = arith.constant 0 : i32
    return %arg0, %c0_i32 : i32, i32
  }
}

</mosaic_0001>

<llo_original>
// kernel: tpu_custom_call.1
$region0: #{tpu_custom_call.1}
  #allocation0 [shape = 'u32[]', space=smem, size = 0x4, offset = 0x4, fixed_abs, tag = 'smem constant byte address 0x4 - core index']
  #allocation1 [shape = 'u32[144,128]{1,0:T(1,128)}', space=vmem, size = 0x12000, scoped, tag = 'internal scratch']
  %s0 = inlined_call_operand.hbm [shape: f32[256,128], index: 0, kind: input, shape index: {}]
  %s1 = inlined_call_operand.hbm [shape: f32[2,256], index: 1, kind: input, shape index: {}]
  %s2 = inlined_call_operand.hbm [shape: f32[2,128], index: 2, kind: output, shape index: {}]
  %s3 = sld [smem:[#allocation0]]
  $region26: #{tpu_custom_call.1} parent=0
    _
  %s5 = ssub.s32 1, %s3
  %s6 = scalar_select 0, %s5, %s3
  $region1: #{tpu_custom_call.1} parent=0
    #allocation2 [shape = 'u8[131072]{0}', space=vmem, size = 0x20000, scoped, tag = 'input window, operand 0, single buffered']
    #allocation3 [shape = 's32[1]{0}', space=sflag, size = 0x4, scoped, tag = 'scoped memory for tpu_custom_call.1']
    #allocation4 [shape = 's32[1]{0}', space=sflag, size = 0x4, scoped, tag = 'scoped memory for tpu_custom_call.1']
    #allocation5 [shape = 'u8[2048]{0}', space=vmem, size = 0x800, scoped, tag = 'input window, operand 1, single buffered']
    #allocation6 [shape = 's32[1]{0}', space=sflag, size = 0x4, scoped, tag = 'scoped memory for tpu_custom_call.1']
    #allocation7 [shape = 'u8[1024]{0}', space=vmem, size = 0x400, scoped, tag = 'output window, operand 0, single buffered']
    %7 = vsyncpa [#allocation3], 0
    %8 = vsyncpa [#allocation6], 0
    %9 = vsyncpa [#allocation4], 0
    // Predicated region
    $region2: #{tpu_custom_call.1} parent=1 // pred_check
      _
    $region3: #{tpu_custom_call.1} parent=1 // pred_check_branch
      %11 = sbr.rel (0) target = $region5
    $region4: #{tpu_custom_call.1} parent=1 // pred_region
      %s13 = ssub.s32 4096, 4096
      %14 = vsyncadd [#allocation3], %s13
      %s15 = sshll.u32 [#allocation2], 4
      %s16 = int_to_ptr.vmem [resolvable:$true] %s15
      %21 = dma.hbm_to_vmem [thread:$0]  %s0, 4096, %s16, [#allocation3], 128, 128, 8
    $region5: #{tpu_custom_call.1} parent=1 // pred_fallthru
      _
    // Predicated region
    $region6: #{tpu_custom_call.1} parent=1 // pred_check
      _
    $region7: #{tpu_custom_call.1} parent=1 // pred_check_branch
      %23 = sbr.rel (0) target = $region9
    $region8: #{tpu_custom_call.1} parent=1 // pred_region
      %s25 = ssub.s32 64, 64
      %26 = vsyncadd [#allocation6], %s25
      %s28 = sshll.u32 [#allocation5], 4
      %s29 = int_to_ptr.vmem [resolvable:$true] %s28
      %31 = dma.hbm_to_vmem [thread:$0]  %s1, 64, %s29, [#allocation6]
    $region9: #{tpu_custom_call.1} parent=1 // pred_fallthru
      _
    // Predicated region
    $region10: #{tpu_custom_call.1} parent=1 // pred_check
      _
    $region11: #{tpu_custom_call.1} parent=1 // pred_check_branch
      %33 = sbr.rel (0) target = $region13
    $region12: #{tpu_custom_call.1} parent=1 // pred_region
      %34 = dma.done [#allocation3], 4096
    $region13: #{tpu_custom_call.1} parent=1 // pred_fallthru
      _
    // Predicated region
    $region14: #{tpu_custom_call.1} parent=1 // pred_check
      _
    $region15: #{tpu_custom_call.1} parent=1 // pred_check_branch
      %36 = sbr.rel (0) target = $region17
    $region16: #{tpu_custom_call.1} parent=1 // pred_region
      %37 = dma.done [#allocation6], 64
    $region17: #{tpu_custom_call.1} parent=1 // pred_fallthru
      _
    %v38 = vld [vmem:[#allocation5] sm:$0xf]
    %v39 = vld [vmem:[#allocation2] sm:$0xff]
    %v40 = vld [vmem:[#allocation2 + $0x8] sm:$0xff]
    %v41 = vld [vmem:[#allocation2 + $0x10] sm:$0xff]
    %v42 = vld [vmem:[#allocation2 + $0x18] sm:$0xff]
    %v43 = vld [vmem:[#allocation2 + $0x20] sm:$0xff]
    %v44 = vld [vmem:[#allocation2 + $0x28] sm:$0xff]
    %v45 = vld [vmem:[#allocation2 + $0x30] sm:$0xff]
    %v46 = vld [vmem:[#allocation2 + $0x38] sm:$0xff]
    %v47 = vld [vmem:[#allocation2 + $0x40] sm:$0xff]
    %v48 = vld [vmem:[#allocation2 + $0x48] sm:$0xff]
    %v49 = vld [vmem:[#allocation2 + $0x50] sm:$0xff]
    %v50 = vld [vmem:[#allocation2 + $0x58] sm:$0xff]
    %v51 = vld [vmem:[#allocation2 + $0x60] sm:$0xff]
    %v52 = vld [vmem:[#allocation2 + $0x68] sm:$0xff]
    %v53 = vld [vmem:[#allocation2 + $0x70] sm:$0xff]
    %v54 = vld [vmem:[#allocation2 + $0x78] sm:$0xff]
    %v55 = vld [vmem:[#allocation2 + $0x80] sm:$0xff]
    %v56 = vld [vmem:[#allocation2 + $0x88] sm:$0xff]
    %v57 = vld [vmem:[#allocation2 + $0x90] sm:$0xff]
    %v58 = vld [vmem:[#allocation2 + $0x98] sm:$0xff]
    %v59 = vld [vmem:[#allocation2 + $0xa0] sm:$0xff]
    %v60 = vld [vmem:[#allocation2 + $0xa8] sm:$0xff]
    %v61 = vld [vmem:[#allocation2 + $0xb0] sm:$0xff]
    %v62 = vld [vmem:[#allocation2 + $0xb8] sm:$0xff]
    %v63 = vld [vmem:[#allocation2 + $0xc0] sm:$0xff]
    %v64 = vld [vmem:[#allocation2 + $0xc8] sm:$0xff]
    %v65 = vld [vmem:[#allocation2 + $0xd0] sm:$0xff]
    %v66 = vld [vmem:[#allocation2 + $0xd8] sm:$0xff]
    %v67 = vld [vmem:[#allocation2 + $0xe0] sm:$0xff]
    %v68 = vld [vmem:[#allocation2 + $0xe8] sm:$0xff]
    %v69 = vld [vmem:[#allocation2 + $0xf0] sm:$0xff]
    %v70 = vld [vmem:[#allocation2 + $0xf8] sm:$0xff]
    %v73 = vunpack.c.l.s4 1983009808
    %v74 = vunpack.c.0.s8 %v73
    %v75 = vlaneseq
    %v76 = vshrl.u32 %v75, 7
    %v77 = vsub.s32 %v74, %v76
    %v78 = vrot.slane %v38, %v77
    %v79 = vcombine.high %v78, %v78
    %82 = vmatprep.subr.mxu0 0.0
    %83 = vmatpush1.msra.mxu0 %v39
    %84 = vmatprep.subr.mxu0 0.0
    %85 = vmatpush1.msra.mxu0 %v40
    %86 = vmatprep.subr.mxu0 0.0
    %87 = vmatpush1.msra.mxu0 %v41
    %88 = vmatprep.subr.mxu0 0.0
    %89 = vmatpush1.msra.mxu0 %v42
    %90 = vmatprep.subr.mxu0 0.0
    %91 = vmatpush1.msra.mxu0 %v43
    %92 = vmatprep.subr.mxu0 0.0
    %93 = vmatpush1.msra.mxu0 %v44
    %94 = vmatprep.subr.mxu0 0.0
    %95 = vmatpush1.msra.mxu0 %v45
    %96 = vmatprep.subr.mxu0 0.0
    %97 = vmatpush1.msra.mxu0 %v46
    %98 = vmatprep.subr.mxu0 0.0
    %99 = vmatpush1.msra.mxu0 %v47
    %100 = vmatprep.subr.mxu0 0.0
    %101 = vmatpush1.msra.mxu0 %v48
    %102 = vmatprep.subr.mxu0 0.0
    %103 = vmatpush1.msra.mxu0 %v49
    %104 = vmatprep.subr.mxu0 0.0
    %105 = vmatpush1.msra.mxu0 %v50
    %106 = vmatprep.subr.mxu0 0.0
    %107 = vmatpush1.msra.mxu0 %v51
    %108 = vmatprep.subr.mxu0 0.0
    %109 = vmatpush1.msra.mxu0 %v52
    %110 = vmatprep.subr.mxu0 0.0
    %111 = vmatpush1.msra.mxu0 %v53
    %112 = vmatprep.subr.mxu0 0.0
    %113 = vmatpush1.msra.mxu0 %v54
    %114 = vmatprep.subr.mxu0 0.0
    %115 = vmatpush1.msra.mxu0 %v55
    %116 = vmatprep.subr.mxu0 0.0
    %117 = vmatpush1.msra.mxu0 %v56
    %118 = vmatprep.subr.mxu0 0.0
    %119 = vmatpush1.msra.mxu0 %v57
    %120 = vmatprep.subr.mxu0 0.0
    %121 = vmatpush1.msra.mxu0 %v58
    %122 = vmatprep.subr.mxu0 0.0
    %123 = vmatpush1.msra.mxu0 %v59
    %124 = vmatprep.subr.mxu0 0.0
    %125 = vmatpush1.msra.mxu0 %v60
    %126 = vmatprep.subr.mxu0 0.0
    %127 = vmatpush1.msra.mxu0 %v61
    %128 = vmatprep.subr.mxu0 0.0
    %129 = vmatpush1.msra.mxu0 %v62
    %130 = vmatprep.subr.mxu0 0.0
    %131 = vmatpush1.msra.mxu0 %v63
    %132 = vmatprep.subr.mxu0 0.0
    %133 = vmatpush1.msra.mxu0 %v64
    %134 = vmatprep.subr.mxu0 0.0
    %135 = vmatpush1.msra.mxu0 %v65
    %136 = vmatprep.subr.mxu0 0.0
    %137 = vmatpush1.msra.mxu0 %v66
    %138 = vmatprep.subr.mxu0 0.0
    %139 = vmatpush1.msra.mxu0 %v67
    %140 = vmatprep.subr.mxu0 0.0
    %141 = vmatpush1.msra.mxu0 %v68
    %142 = vmatprep.subr.mxu0 0.0
    %143 = vmatpush1.msra.mxu0 %v69
    %144 = vmatprep.subr.mxu0 0.0
    %145 = vmatpush1.msra.mxu0 %v70
    %146 = vmatprep.mubr.f32.mxu0 %v79
    %147 = vmatmul.mubr.f32.gmra.mrb[0].mxu0 %v78
    %v148 = vpop.f32.mrb[0].mxu0
    %v149 = vadd.f32 0.0, %v148
    %v150 = vpop.f32.mrb[0].mxu0
    %151 = vdwg.mxu0
    %152 = vst [vmem:[#allocation7] sm:$0x3] %v149
    // Predicated region
    $region18: #{tpu_custom_call.1} parent=1 // pred_check
      _
    $region19: #{tpu_custom_call.1} parent=1 // pred_check_branch
      %154 = sbr.rel (0) target = $region21
    $region20: #{tpu_custom_call.1} parent=1 // pred_region
      %s156 = ssub.s32 32, 32
      %157 = vsyncadd [#allocation4], %s156
      %s159 = sshll.u32 [#allocation7], 4
      %s160 = int_to_ptr.vmem [resolvable:$true] %s159
      %162 = dma.vmem_to_hbm [thread:$0]  %s160, 32, %s2, [#allocation4]
    $region21: #{tpu_custom_call.1} parent=1 // pred_fallthru
      _
    // Predicated region
    $region22: #{tpu_custom_call.1} parent=1 // pred_check
      _
    $region23: #{tpu_custom_call.1} parent=1 // pred_check_branch
      %164 = sbr.rel (0) target = $region25
    $region24: #{tpu_custom_call.1} parent=1 // pred_region
      %165 = dma.done [#allocation4], 32
    $region25: #{tpu_custom_call.1} parent=1 // pred_fallthru
      _
    %166 = vsyncpa [#allocation3], 1
    %167 = vsyncpa [#allocation6], 1
    %168 = vsyncpa [#allocation4], 1

</llo_original>
